<compile_context>
chip_gen: v5e
topology: v5e:2x2
jax: 0.10.0
libtpu: 0.0.40
codegen_flags: <defaults>
</compile_context>

<pallas_src>
import math
import jax
import jax.numpy as jnp
from jax.experimental import pallas as pl
from jax.experimental.pallas import tpu as pltpu

# ---------------- model dimensions (small, deterministic) ----------------
B = 2          # batch
S = 8          # sequence length
H = 32         # hidden size (bert.config.hidden_size)
NH = 2         # attention heads
DH = H // NH   # head dim
F = 64         # FFN intermediate
VOCAB = 64
MID = 128      # linear1 output
CLASSES = 3


def _layer_norm(x, gamma, beta, eps=1e-12):
    mean = jnp.mean(x, axis=-1, keepdims=True)
    var = jnp.mean(jnp.square(x - mean), axis=-1, keepdims=True)
    return (x - mean) * jax.lax.rsqrt(var + eps) * gamma + beta


def _gelu(x):
    # tanh approximation of GELU (BERT-style).
    # TODO(synk): HF BERT default is exact erf-based gelu; tanh approx kept for the
    #             synthetic stand-in backbone.
    c = math.sqrt(2.0 / math.pi)
    return 0.5 * x * (1.0 + jnp.tanh(c * (x + 0.044715 * x * x * x)))


# ---------------------------------------------------------------------------
# Single fused Pallas kernel:
#   encoder layer (fused QKV, batched attention, FFN, layernorms)
#   -> CLS extraction -> dropout(identity) -> linear1 -> dropout(identity) -> linear2
# ---------------------------------------------------------------------------
def qa_kernel(x_ref, bias_ref,
              wqkv_ref, bqkv_ref, wo_ref, bo_ref,
              ln1g_ref, ln1b_ref,
              w1_ref, b1_ref, w2_ref, b2_ref,
              ln2g_ref, ln2b_ref,
              l1w_ref, l1b_ref, l2w_ref, l2b_ref,
              out_ref):
    x2 = x_ref[...]                 # (B*S, H)  batch folded into M
    bias = bias_ref[...]            # (B, 1, S) additive attention bias (0 / -1e9)

    # Fused Q|K|V projection: one (B*S, H) x (H, 3H) MXU pass.
    qkv = jnp.dot(x2, wqkv_ref[...], preferred_element_type=jnp.float32) + bqkv_ref[0]

    scale = 1.0 / math.sqrt(DH)
    wo = wo_ref[...]                # (H, H)
    attn2 = jnp.zeros((B * S, H), jnp.float32)

    # Static unroll over heads; each head's W_o row-slice is applied inside the
    # loop and accumulated, so there is no lane-axis concat / relayout.
    for h in range(NH):
        q_off = 0 * H + h * DH
        k_off = 1 * H + h * DH
        v_off = 2 * H + h * DH
        qh = qkv[:, q_off:q_off + DH].reshape(B, S, DH)
        kh = qkv[:, k_off:k_off + DH].reshape(B, S, DH)
        vh = qkv[:, v_off:v_off + DH].reshape(B, S, DH)

        s = jnp.einsum('bqd,bkd->bqk', qh, kh,
                       preferred_element_type=jnp.float32) * scale
        s = s + bias                                     # (B, S, S)
        s = s - jnp.max(s, axis=-1, keepdims=True)
        p = jnp.exp(s)
        p = p * pl.reciprocal(jnp.sum(p, axis=-1, keepdims=True), approx=True)

        ctx_h = jnp.einsum('bqk,bkd->bqd', p, vh,
                           preferred_element_type=jnp.float32)   # (B, S, DH)
        attn2 = attn2 + jnp.dot(ctx_h.reshape(B * S, DH),
                                wo[h * DH:(h + 1) * DH, :],
                                preferred_element_type=jnp.float32)

    attn2 = attn2 + bo_ref[0]
    x1 = _layer_norm(x2 + attn2, ln1g_ref[0], ln1b_ref[0])        # (B*S, H)

    # FFN (batch folded into M).
    hmid = jnp.dot(x1, w1_ref[...], preferred_element_type=jnp.float32) + b1_ref[0]
    hmid = _gelu(hmid)
    ffn = jnp.dot(hmid, w2_ref[...], preferred_element_type=jnp.float32) + b2_ref[0]
    hout = _layer_norm(x1 + ffn, ln2g_ref[0], ln2b_ref[0])        # (B*S, H) = last_hidden_state

    # Classifier head, fused: CLS token = row 0 of each sequence.
    cls = jnp.concatenate([hout[b * S:b * S + 1, :] for b in range(B)], axis=0)  # (B, H)
    # dropout1: identity (eval)
    hcls = jnp.dot(cls, l1w_ref[...], preferred_element_type=jnp.float32) + l1b_ref[0]
    # dropout2: identity (eval)
    out_ref[...] = jnp.dot(hcls, l2w_ref[...], preferred_element_type=jnp.float32) + l2b_ref[0]


def run_qa_kernel(x_flat, attn_bias, params):
    # Single invocation, no grid: everything (activations + weights, <100 KiB)
    # lives as full blocks in VMEM.
    return pl.pallas_call(
        qa_kernel,
        out_shape=jax.ShapeDtypeStruct((B, CLASSES), jnp.float32),
    )(x_flat, attn_bias,
      params["wqkv"], params["bqkv"], params["wo"], params["bo"],
      params["ln1g"], params["ln1b"],
      params["w1"], params["b1"], params["w2"], params["b2"],
      params["ln2g"], params["ln2b"],
      params["lin1_w"], params["lin1_b"], params["lin2_w"], params["lin2_b"])


# ---------------------------------------------------------------------------
# Parameter init (deterministic) + full forward
# ---------------------------------------------------------------------------
def init_params(key):
    ks = jax.random.split(key, 16)
    n = lambda k, shape, s=0.02: (s * jax.random.normal(k, shape)).astype(jnp.float32)
    z = lambda shape: jnp.zeros(shape, jnp.float32)
    o = lambda shape: jnp.ones(shape, jnp.float32)

    wq = n(ks[2], (H, H))
    wk = n(ks[3], (H, H))
    wv = n(ks[4], (H, H))
    return {
        # embeddings (glue)
        "word_emb": n(ks[0], (VOCAB, H)),
        "pos_emb": n(ks[1], (S, H)),
        "emb_ln_g": o((H,)), "emb_ln_b": z((H,)),
        # encoder layer (Q|K|V fused into one (H, 3H) weight)
        "wqkv": jnp.concatenate([wq, wk, wv], axis=1),
        "bqkv": z((1, 3 * H)),
        "wo": n(ks[5], (H, H)), "bo": z((1, H)),
        "ln1g": o((1, H)), "ln1b": z((1, H)),
        "w1": n(ks[6], (H, F)), "b1": z((1, F)),
        "w2": n(ks[7], (F, H)), "b2": z((1, H)),
        "ln2g": o((1, H)), "ln2b": z((1, H)),
        # classifier head (stored transposed: y = x @ W + b)
        "lin1_w": n(ks[8], (H, MID)), "lin1_b": z((1, MID)),
        "lin2_w": n(ks[9], (MID, CLASSES)), "lin2_b": z((1, CLASSES)),
    }


def qa_model_forward(input_ids, attention_mask, params):
    # ---- glue: embedding lookup + embedding layernorm (plain JAX) ----
    x = jnp.take(params["word_emb"], input_ids, axis=0) + params["pos_emb"][None, :, :]
    x = _layer_norm(x, params["emb_ln_g"], params["emb_ln_b"]).astype(jnp.float32)
    x_flat = x.reshape(B * S, H)                                  # fold batch into M
    attn_bias = (attention_mask.astype(jnp.float32).reshape(B, 1, S) - 1.0) * 1e9

    # ---- single fused Pallas kernel: encoder layer + classifier head ----
    logits = run_qa_kernel(x_flat, attn_bias, params)
    return logits


if __name__ == "__main__":
    key = jax.random.PRNGKey(0)
    kp, kid = jax.random.split(key)
    params = init_params(kp)

    input_ids = jax.random.randint(kid, (B, S), 0, VOCAB, dtype=jnp.int32)
    attention_mask = jnp.array(
        [[1] * S, [1] * (S - 3) + [0] * 3], dtype=jnp.int32)  # second example padded

    logits = qa_model_forward(input_ids, attention_mask, params)
    jax.block_until_ready(logits)
    assert logits.shape == (B, CLASSES) and logits.dtype == jnp.float32
    print("KERNEL_OK")
</pallas_src>

<mosaic_0001>
module attributes {stable_mosaic.version = 11 : i64} {
  func.func @qa_kernel(%arg0: memref<16x32xf32, #tpu.memory_space<vmem>>, %arg1: memref<2x1x8xf32, #tpu.memory_space<vmem>>, %arg2: memref<32x96xf32, #tpu.memory_space<vmem>>, %arg3: memref<1x96xf32, #tpu.memory_space<vmem>>, %arg4: memref<32x32xf32, #tpu.memory_space<vmem>>, %arg5: memref<1x32xf32, #tpu.memory_space<vmem>>, %arg6: memref<1x32xf32, #tpu.memory_space<vmem>>, %arg7: memref<1x32xf32, #tpu.memory_space<vmem>>, %arg8: memref<32x64xf32, #tpu.memory_space<vmem>>, %arg9: memref<1x64xf32, #tpu.memory_space<vmem>>, %arg10: memref<64x32xf32, #tpu.memory_space<vmem>>, %arg11: memref<1x32xf32, #tpu.memory_space<vmem>>, %arg12: memref<1x32xf32, #tpu.memory_space<vmem>>, %arg13: memref<1x32xf32, #tpu.memory_space<vmem>>, %arg14: memref<32x128xf32, #tpu.memory_space<vmem>>, %arg15: memref<1x128xf32, #tpu.memory_space<vmem>>, %arg16: memref<128x3xf32, #tpu.memory_space<vmem>>, %arg17: memref<1x3xf32, #tpu.memory_space<vmem>>, %arg18: memref<2x3xf32, #tpu.memory_space<vmem>>) attributes {dimension_semantics = [], scalar_prefetch = 0 : i64, scratch_operands = 0 : i64, tpu.core_type = #tpu.core_type<tc>} {
    %c0 = arith.constant 0 : index
    %c0_0 = arith.constant 0 : index
    %0 = vector.load %arg0[%c0, %c0_0] : memref<16x32xf32, #tpu.memory_space<vmem>>, vector<16x32xf32>
    %c0_1 = arith.constant 0 : index
    %c0_2 = arith.constant 0 : index
    %c0_3 = arith.constant 0 : index
    %1 = vector.load %arg1[%c0_1, %c0_2, %c0_3] : memref<2x1x8xf32, #tpu.memory_space<vmem>>, vector<2x1x8xf32>
    %c0_4 = arith.constant 0 : index
    %c0_5 = arith.constant 0 : index
    %2 = vector.load %arg2[%c0_4, %c0_5] : memref<32x96xf32, #tpu.memory_space<vmem>>, vector<32x96xf32>
    %cst = arith.constant dense<0.000000e+00> : vector<16x96xf32>
    %3 = tpu.matmul %0, %2, %cst {dimension_numbers = #tpu.dot_dimension_numbers<[1], [0], [0], [1], [0, 0, 1, 1], [], []>} : vector<16x32xf32>, vector<32x96xf32>, vector<16x96xf32> -> vector<16x96xf32>
    %c0_6 = arith.constant 0 : index
    %c0_7 = arith.constant 0 : index
    %4 = vector.load %arg3[%c0_6, %c0_7] : memref<1x96xf32, #tpu.memory_space<vmem>>, vector<1x96xf32>
    %5 = vector.shape_cast %4 : vector<1x96xf32> to vector<96xf32>
    %6 = vector.shape_cast %5 : vector<96xf32> to vector<1x96xf32>
    %7 = vector.broadcast %6 : vector<1x96xf32> to vector<16x96xf32>
    %8 = arith.addf %3, %7 : vector<16x96xf32>
    %c0_8 = arith.constant 0 : index
    %c0_9 = arith.constant 0 : index
    %9 = vector.load %arg4[%c0_8, %c0_9] : memref<32x32xf32, #tpu.memory_space<vmem>>, vector<32x32xf32>
    %cst_10 = arith.constant 0.000000e+00 : f32
    %10 = vector.broadcast %cst_10 : f32 to vector<16x32xf32>
    %11 = vector.extract_strided_slice %8 {offsets = [0, 0], sizes = [16, 16], strides = [1, 1]} : vector<16x96xf32> to vector<16x16xf32>
    %12 = vector.shape_cast %11 : vector<16x16xf32> to vector<2x8x16xf32>
    %13 = vector.extract_strided_slice %8 {offsets = [0, 32], sizes = [16, 16], strides = [1, 1]} : vector<16x96xf32> to vector<16x16xf32>
    %14 = vector.shape_cast %13 : vector<16x16xf32> to vector<2x8x16xf32>
    %15 = vector.extract_strided_slice %8 {offsets = [0, 64], sizes = [16, 16], strides = [1, 1]} : vector<16x96xf32> to vector<16x16xf32>
    %16 = vector.shape_cast %15 : vector<16x16xf32> to vector<2x8x16xf32>
    "tpu.trace_start"() <{level = 10 : i32, message = "bqd,bkd->bqk"}> : () -> ()
    %cst_11 = arith.constant dense<0.000000e+00> : vector<2x8x8xf32>
    %17 = tpu.matmul %12, %14, %cst_11 {dimension_numbers = #tpu.dot_dimension_numbers<[2], [2], [1], [1], [0, 0, 0, 1, 1, 1], [0], [0]>} : vector<2x8x16xf32>, vector<2x8x16xf32>, vector<2x8x8xf32> -> vector<2x8x8xf32>
    "tpu.trace_stop"() : () -> ()
    %cst_12 = arith.constant 2.500000e-01 : f32
    %18 = vector.broadcast %cst_12 : f32 to vector<2x8x8xf32>
    %19 = arith.mulf %17, %18 : vector<2x8x8xf32>
    %20 = vector.broadcast %1 : vector<2x1x8xf32> to vector<2x8x8xf32>
    %21 = arith.addf %19, %20 : vector<2x8x8xf32>
    %cst_13 = arith.constant dense<0xFF800000> : vector<2x8xf32>
    %22 = vector.multi_reduction <maximumf>, %21, %cst_13 [2] : vector<2x8x8xf32> to vector<2x8xf32>
    %23 = vector.shape_cast %22 : vector<2x8xf32> to vector<2x8x1xf32>
    %24 = vector.broadcast %23 : vector<2x8x1xf32> to vector<2x8x8xf32>
    %25 = arith.subf %21, %24 : vector<2x8x8xf32>
    %26 = math.exp %25 : vector<2x8x8xf32>
    %cst_14 = arith.constant dense<0.000000e+00> : vector<2x8xf32>
    %27 = vector.multi_reduction <add>, %26, %cst_14 [2] : vector<2x8x8xf32> to vector<2x8xf32>
    %28 = vector.shape_cast %27 : vector<2x8xf32> to vector<2x8x1xf32>
    %29 = tpu.reciprocal %28 {approx = true} : vector<2x8x1xf32> -> vector<2x8x1xf32>
    %30 = vector.broadcast %29 : vector<2x8x1xf32> to vector<2x8x8xf32>
    %31 = arith.mulf %26, %30 : vector<2x8x8xf32>
    "tpu.trace_start"() <{level = 10 : i32, message = "bqk,bkd->bqd"}> : () -> ()
    %cst_15 = arith.constant dense<0.000000e+00> : vector<2x8x16xf32>
    %32 = tpu.matmul %31, %16, %cst_15 {dimension_numbers = #tpu.dot_dimension_numbers<[2], [1], [1], [2], [0, 0, 0, 1, 1, 2], [0], [0]>} : vector<2x8x8xf32>, vector<2x8x16xf32>, vector<2x8x16xf32> -> vector<2x8x16xf32>
    "tpu.trace_stop"() : () -> ()
    %33 = vector.shape_cast %32 : vector<2x8x16xf32> to vector<16x16xf32>
    %34 = vector.extract_strided_slice %9 {offsets = [0, 0], sizes = [16, 32], strides = [1, 1]} : vector<32x32xf32> to vector<16x32xf32>
    %cst_16 = arith.constant dense<0.000000e+00> : vector<16x32xf32>
    %35 = tpu.matmul %33, %34, %cst_16 {dimension_numbers = #tpu.dot_dimension_numbers<[1], [0], [0], [1], [0, 0, 1, 1], [], []>} : vector<16x16xf32>, vector<16x32xf32>, vector<16x32xf32> -> vector<16x32xf32>
    %36 = arith.addf %10, %35 : vector<16x32xf32>
    %37 = vector.extract_strided_slice %8 {offsets = [0, 16], sizes = [16, 16], strides = [1, 1]} : vector<16x96xf32> to vector<16x16xf32>
    %38 = vector.shape_cast %37 : vector<16x16xf32> to vector<2x8x16xf32>
    %39 = vector.extract_strided_slice %8 {offsets = [0, 48], sizes = [16, 16], strides = [1, 1]} : vector<16x96xf32> to vector<16x16xf32>
    %40 = vector.shape_cast %39 : vector<16x16xf32> to vector<2x8x16xf32>
    %41 = vector.extract_strided_slice %8 {offsets = [0, 80], sizes = [16, 16], strides = [1, 1]} : vector<16x96xf32> to vector<16x16xf32>
    %42 = vector.shape_cast %41 : vector<16x16xf32> to vector<2x8x16xf32>
    "tpu.trace_start"() <{level = 10 : i32, message = "bqd,bkd->bqk"}> : () -> ()
    %cst_17 = arith.constant dense<0.000000e+00> : vector<2x8x8xf32>
    %43 = tpu.matmul %38, %40, %cst_17 {dimension_numbers = #tpu.dot_dimension_numbers<[2], [2], [1], [1], [0, 0, 0, 1, 1, 1], [0], [0]>} : vector<2x8x16xf32>, vector<2x8x16xf32>, vector<2x8x8xf32> -> vector<2x8x8xf32>
    "tpu.trace_stop"() : () -> ()
    %cst_18 = arith.constant 2.500000e-01 : f32
    %44 = vector.broadcast %cst_18 : f32 to vector<2x8x8xf32>
    %45 = arith.mulf %43, %44 : vector<2x8x8xf32>
    %46 = vector.broadcast %1 : vector<2x1x8xf32> to vector<2x8x8xf32>
    %47 = arith.addf %45, %46 : vector<2x8x8xf32>
    %cst_19 = arith.constant dense<0xFF800000> : vector<2x8xf32>
    %48 = vector.multi_reduction <maximumf>, %47, %cst_19 [2] : vector<2x8x8xf32> to vector<2x8xf32>
    %49 = vector.shape_cast %48 : vector<2x8xf32> to vector<2x8x1xf32>
    %50 = vector.broadcast %49 : vector<2x8x1xf32> to vector<2x8x8xf32>
    %51 = arith.subf %47, %50 : vector<2x8x8xf32>
    %52 = math.exp %51 : vector<2x8x8xf32>
    %cst_20 = arith.constant dense<0.000000e+00> : vector<2x8xf32>
    %53 = vector.multi_reduction <add>, %52, %cst_20 [2] : vector<2x8x8xf32> to vector<2x8xf32>
    %54 = vector.shape_cast %53 : vector<2x8xf32> to vector<2x8x1xf32>
    %55 = tpu.reciprocal %54 {approx = true} : vector<2x8x1xf32> -> vector<2x8x1xf32>
    %56 = vector.broadcast %55 : vector<2x8x1xf32> to vector<2x8x8xf32>
    %57 = arith.mulf %52, %56 : vector<2x8x8xf32>
    "tpu.trace_start"() <{level = 10 : i32, message = "bqk,bkd->bqd"}> : () -> ()
    %cst_21 = arith.constant dense<0.000000e+00> : vector<2x8x16xf32>
    %58 = tpu.matmul %57, %42, %cst_21 {dimension_numbers = #tpu.dot_dimension_numbers<[2], [1], [1], [2], [0, 0, 0, 1, 1, 2], [0], [0]>} : vector<2x8x8xf32>, vector<2x8x16xf32>, vector<2x8x16xf32> -> vector<2x8x16xf32>
    "tpu.trace_stop"() : () -> ()
    %59 = vector.shape_cast %58 : vector<2x8x16xf32> to vector<16x16xf32>
    %60 = vector.extract_strided_slice %9 {offsets = [16, 0], sizes = [16, 32], strides = [1, 1]} : vector<32x32xf32> to vector<16x32xf32>
    %cst_22 = arith.constant dense<0.000000e+00> : vector<16x32xf32>
    %61 = tpu.matmul %59, %60, %cst_22 {dimension_numbers = #tpu.dot_dimension_numbers<[1], [0], [0], [1], [0, 0, 1, 1], [], []>} : vector<16x16xf32>, vector<16x32xf32>, vector<16x32xf32> -> vector<16x32xf32>
    %62 = arith.addf %36, %61 : vector<16x32xf32>
    %c0_23 = arith.constant 0 : index
    %c0_24 = arith.constant 0 : index
    %63 = vector.load %arg5[%c0_23, %c0_24] : memref<1x32xf32, #tpu.memory_space<vmem>>, vector<1x32xf32>
    %64 = vector.shape_cast %63 : vector<1x32xf32> to vector<32xf32>
    %65 = vector.shape_cast %64 : vector<32xf32> to vector<1x32xf32>
    %66 = vector.broadcast %65 : vector<1x32xf32> to vector<16x32xf32>
    %67 = arith.addf %62, %66 : vector<16x32xf32>
    %68 = arith.addf %0, %67 : vector<16x32xf32>
    %c0_25 = arith.constant 0 : index
    %c0_26 = arith.constant 0 : index
    %69 = vector.load %arg6[%c0_25, %c0_26] : memref<1x32xf32, #tpu.memory_space<vmem>>, vector<1x32xf32>
    %70 = vector.shape_cast %69 : vector<1x32xf32> to vector<32xf32>
    %c0_27 = arith.constant 0 : index
    %c0_28 = arith.constant 0 : index
    %71 = vector.load %arg7[%c0_27, %c0_28] : memref<1x32xf32, #tpu.memory_space<vmem>>, vector<1x32xf32>
    %72 = vector.shape_cast %71 : vector<1x32xf32> to vector<32xf32>
    %cst_29 = arith.constant dense<0.000000e+00> : vector<16xf32>
    %73 = vector.multi_reduction <add>, %68, %cst_29 [1] : vector<16x32xf32> to vector<16xf32>
    %74 = vector.shape_cast %73 : vector<16xf32> to vector<16x1xf32>
    %cst_30 = arith.constant 3.200000e+01 : f32
    %75 = vector.broadcast %cst_30 : f32 to vector<16x1xf32>
    %76 = arith.divf %74, %75 : vector<16x1xf32>
    %77 = vector.broadcast %76 : vector<16x1xf32> to vector<16x32xf32>
    %78 = arith.subf %68, %77 : vector<16x32xf32>
    %79 = arith.mulf %78, %78 : vector<16x32xf32>
    %cst_31 = arith.constant dense<0.000000e+00> : vector<16xf32>
    %80 = vector.multi_reduction <add>, %79, %cst_31 [1] : vector<16x32xf32> to vector<16xf32>
    %81 = vector.shape_cast %80 : vector<16xf32> to vector<16x1xf32>
    %cst_32 = arith.constant 3.200000e+01 : f32
    %82 = vector.broadcast %cst_32 : f32 to vector<16x1xf32>
    %83 = arith.divf %81, %82 : vector<16x1xf32>
    %84 = vector.broadcast %76 : vector<16x1xf32> to vector<16x32xf32>
    %85 = arith.subf %68, %84 : vector<16x32xf32>
    %cst_33 = arith.constant 9.99999996E-13 : f32
    %86 = vector.broadcast %cst_33 : f32 to vector<16x1xf32>
    %87 = arith.addf %83, %86 : vector<16x1xf32>
    %88 = math.rsqrt %87 : vector<16x1xf32>
    %89 = vector.broadcast %88 : vector<16x1xf32> to vector<16x32xf32>
    %90 = arith.mulf %85, %89 : vector<16x32xf32>
    %91 = vector.shape_cast %70 : vector<32xf32> to vector<1x32xf32>
    %92 = vector.broadcast %91 : vector<1x32xf32> to vector<16x32xf32>
    %93 = arith.mulf %90, %92 : vector<16x32xf32>
    %94 = vector.shape_cast %72 : vector<32xf32> to vector<1x32xf32>
    %95 = vector.broadcast %94 : vector<1x32xf32> to vector<16x32xf32>
    %96 = arith.addf %93, %95 : vector<16x32xf32>
    %c0_34 = arith.constant 0 : index
    %c0_35 = arith.constant 0 : index
    %97 = vector.load %arg8[%c0_34, %c0_35] : memref<32x64xf32, #tpu.memory_space<vmem>>, vector<32x64xf32>
    %cst_36 = arith.constant dense<0.000000e+00> : vector<16x64xf32>
    %98 = tpu.matmul %96, %97, %cst_36 {dimension_numbers = #tpu.dot_dimension_numbers<[1], [0], [0], [1], [0, 0, 1, 1], [], []>} : vector<16x32xf32>, vector<32x64xf32>, vector<16x64xf32> -> vector<16x64xf32>
    %c0_37 = arith.constant 0 : index
    %c0_38 = arith.constant 0 : index
    %99 = vector.load %arg9[%c0_37, %c0_38] : memref<1x64xf32, #tpu.memory_space<vmem>>, vector<1x64xf32>
    %100 = vector.shape_cast %99 : vector<1x64xf32> to vector<64xf32>
    %101 = vector.shape_cast %100 : vector<64xf32> to vector<1x64xf32>
    %102 = vector.broadcast %101 : vector<1x64xf32> to vector<16x64xf32>
    %103 = arith.addf %98, %102 : vector<16x64xf32>
    %cst_39 = arith.constant 5.000000e-01 : f32
    %104 = vector.broadcast %cst_39 : f32 to vector<16x64xf32>
    %105 = arith.mulf %104, %103 : vector<16x64xf32>
    %cst_40 = arith.constant 4.471500e-02 : f32
    %106 = vector.broadcast %cst_40 : f32 to vector<16x64xf32>
    %107 = arith.mulf %106, %103 : vector<16x64xf32>
    %108 = arith.mulf %107, %103 : vector<16x64xf32>
    %109 = arith.mulf %108, %103 : vector<16x64xf32>
    %110 = arith.addf %103, %109 : vector<16x64xf32>
    %cst_41 = arith.constant 0.797884583 : f32
    %111 = vector.broadcast %cst_41 : f32 to vector<16x64xf32>
    %112 = arith.mulf %111, %110 : vector<16x64xf32>
    %113 = math.tanh %112 : vector<16x64xf32>
    %cst_42 = arith.constant 1.000000e+00 : f32
    %114 = vector.broadcast %cst_42 : f32 to vector<16x64xf32>
    %115 = arith.addf %114, %113 : vector<16x64xf32>
    %116 = arith.mulf %105, %115 : vector<16x64xf32>
    %c0_43 = arith.constant 0 : index
    %c0_44 = arith.constant 0 : index
    %117 = vector.load %arg10[%c0_43, %c0_44] : memref<64x32xf32, #tpu.memory_space<vmem>>, vector<64x32xf32>
    %cst_45 = arith.constant dense<0.000000e+00> : vector<16x32xf32>
    %118 = tpu.matmul %116, %117, %cst_45 {dimension_numbers = #tpu.dot_dimension_numbers<[1], [0], [0], [1], [0, 0, 1, 1], [], []>} : vector<16x64xf32>, vector<64x32xf32>, vector<16x32xf32> -> vector<16x32xf32>
    %c0_46 = arith.constant 0 : index
    %c0_47 = arith.constant 0 : index
    %119 = vector.load %arg11[%c0_46, %c0_47] : memref<1x32xf32, #tpu.memory_space<vmem>>, vector<1x32xf32>
    %120 = vector.shape_cast %119 : vector<1x32xf32> to vector<32xf32>
    %121 = vector.shape_cast %120 : vector<32xf32> to vector<1x32xf32>
    %122 = vector.broadcast %121 : vector<1x32xf32> to vector<16x32xf32>
    %123 = arith.addf %118, %122 : vector<16x32xf32>
    %124 = arith.addf %96, %123 : vector<16x32xf32>
    %c0_48 = arith.constant 0 : index
    %c0_49 = arith.constant 0 : index
    %125 = vector.load %arg12[%c0_48, %c0_49] : memref<1x32xf32, #tpu.memory_space<vmem>>, vector<1x32xf32>
    %126 = vector.shape_cast %125 : vector<1x32xf32> to vector<32xf32>
    %c0_50 = arith.constant 0 : index
    %c0_51 = arith.constant 0 : index
    %127 = vector.load %arg13[%c0_50, %c0_51] : memref<1x32xf32, #tpu.memory_space<vmem>>, vector<1x32xf32>
    %128 = vector.shape_cast %127 : vector<1x32xf32> to vector<32xf32>
    %cst_52 = arith.constant dense<0.000000e+00> : vector<16xf32>
    %129 = vector.multi_reduction <add>, %124, %cst_52 [1] : vector<16x32xf32> to vector<16xf32>
    %130 = vector.shape_cast %129 : vector<16xf32> to vector<16x1xf32>
    %cst_53 = arith.constant 3.200000e+01 : f32
    %131 = vector.broadcast %cst_53 : f32 to vector<16x1xf32>
    %132 = arith.divf %130, %131 : vector<16x1xf32>
    %133 = vector.broadcast %132 : vector<16x1xf32> to vector<16x32xf32>
    %134 = arith.subf %124, %133 : vector<16x32xf32>
    %135 = arith.mulf %134, %134 : vector<16x32xf32>
    %cst_54 = arith.constant dense<0.000000e+00> : vector<16xf32>
    %136 = vector.multi_reduction <add>, %135, %cst_54 [1] : vector<16x32xf32> to vector<16xf32>
    %137 = vector.shape_cast %136 : vector<16xf32> to vector<16x1xf32>
    %cst_55 = arith.constant 3.200000e+01 : f32
    %138 = vector.broadcast %cst_55 : f32 to vector<16x1xf32>
    %139 = arith.divf %137, %138 : vector<16x1xf32>
    %140 = vector.broadcast %132 : vector<16x1xf32> to vector<16x32xf32>
    %141 = arith.subf %124, %140 : vector<16x32xf32>
    %cst_56 = arith.constant 9.99999996E-13 : f32
    %142 = vector.broadcast %cst_56 : f32 to vector<16x1xf32>
    %143 = arith.addf %139, %142 : vector<16x1xf32>
    %144 = math.rsqrt %143 : vector<16x1xf32>
    %145 = vector.broadcast %144 : vector<16x1xf32> to vector<16x32xf32>
    %146 = arith.mulf %141, %145 : vector<16x32xf32>
    %147 = vector.shape_cast %126 : vector<32xf32> to vector<1x32xf32>
    %148 = vector.broadcast %147 : vector<1x32xf32> to vector<16x32xf32>
    %149 = arith.mulf %146, %148 : vector<16x32xf32>
    %150 = vector.shape_cast %128 : vector<32xf32> to vector<1x32xf32>
    %151 = vector.broadcast %150 : vector<1x32xf32> to vector<16x32xf32>
    %152 = arith.addf %149, %151 : vector<16x32xf32>
    %153 = vector.extract_strided_slice %152 {offsets = [0, 0], sizes = [1, 32], strides = [1, 1]} : vector<16x32xf32> to vector<1x32xf32>
    %154 = vector.extract_strided_slice %152 {offsets = [8, 0], sizes = [1, 32], strides = [1, 1]} : vector<16x32xf32> to vector<1x32xf32>
    %155 = tpu.concatenate %153, %154 in 0 : vector<1x32xf32>, vector<1x32xf32> -> vector<2x32xf32>
    %c0_57 = arith.constant 0 : index
    %c0_58 = arith.constant 0 : index
    %156 = vector.load %arg14[%c0_57, %c0_58] : memref<32x128xf32, #tpu.memory_space<vmem>>, vector<32x128xf32>
    %cst_59 = arith.constant dense<0.000000e+00> : vector<2x128xf32>
    %157 = tpu.matmul %155, %156, %cst_59 {dimension_numbers = #tpu.dot_dimension_numbers<[1], [0], [0], [1], [0, 0, 1, 1], [], []>} : vector<2x32xf32>, vector<32x128xf32>, vector<2x128xf32> -> vector<2x128xf32>
    %c0_60 = arith.constant 0 : index
    %c0_61 = arith.constant 0 : index
    %158 = vector.load %arg15[%c0_60, %c0_61] : memref<1x128xf32, #tpu.memory_space<vmem>>, vector<1x128xf32>
    %159 = vector.shape_cast %158 : vector<1x128xf32> to vector<128xf32>
    %160 = vector.shape_cast %159 : vector<128xf32> to vector<1x128xf32>
    %161 = vector.broadcast %160 : vector<1x128xf32> to vector<2x128xf32>
    %162 = arith.addf %157, %161 : vector<2x128xf32>
    %c0_62 = arith.constant 0 : index
    %c0_63 = arith.constant 0 : index
    %163 = vector.load %arg16[%c0_62, %c0_63] : memref<128x3xf32, #tpu.memory_space<vmem>>, vector<128x3xf32>
    %cst_64 = arith.constant dense<0.000000e+00> : vector<2x3xf32>
    %164 = tpu.matmul %162, %163, %cst_64 {dimension_numbers = #tpu.dot_dimension_numbers<[1], [0], [0], [1], [0, 0, 1, 1], [], []>} : vector<2x128xf32>, vector<128x3xf32>, vector<2x3xf32> -> vector<2x3xf32>
    %c0_65 = arith.constant 0 : index
    %c0_66 = arith.constant 0 : index
    %165 = vector.load %arg17[%c0_65, %c0_66] : memref<1x3xf32, #tpu.memory_space<vmem>>, vector<1x3xf32>
    %166 = vector.shape_cast %165 : vector<1x3xf32> to vector<3xf32>
    %167 = vector.shape_cast %166 : vector<3xf32> to vector<1x3xf32>
    %168 = vector.broadcast %167 : vector<1x3xf32> to vector<2x3xf32>
    %169 = arith.addf %164, %168 : vector<2x3xf32>
    %c0_67 = arith.constant 0 : index
    %c0_68 = arith.constant 0 : index
    %170 = vector.load %arg18[%c0_67, %c0_68] : memref<2x3xf32, #tpu.memory_space<vmem>>, vector<2x3xf32>
    tpu.vector_store %arg18[%c0_67, %c0_68], %169 {strides = array<i32>} : memref<2x3xf32, #tpu.memory_space<vmem>>, vector<2x3xf32>,
    return
  }
}

</mosaic_0001>

<llo_original>
// kernel: tpu_custom_call.1
$region0: #{tpu_custom_call.1}
  #allocation0 [shape = 'u32[]', space=smem, size = 0x4, offset = 0x4, fixed_abs, tag = 'smem constant byte address 0x4 - core index']
  #allocation1 [shape = 'u32[72,128]{1,0:T(1,128)}', space=vmem, size = 0x9000, scoped, tag = 'internal scratch']
  %s0 = inlined_call_operand.vmem [shape: f32[16,32], index: 0, kind: input, shape index: {}]
  %s1 = inlined_call_operand.vmem [shape: f32[2,1,8], index: 1, kind: input, shape index: {}]
  %s2 = inlined_call_operand.vmem [shape: f32[32,96], index: 2, kind: input, shape index: {}]
  %s3 = inlined_call_operand.vmem [shape: f32[1,96], index: 3, kind: input, shape index: {}]
  %s4 = inlined_call_operand.vmem [shape: f32[32,32], index: 4, kind: input, shape index: {}]
  %s5 = inlined_call_operand.vmem [shape: f32[1,32], index: 5, kind: input, shape index: {}]
  %s6 = inlined_call_operand.vmem [shape: f32[1,32], index: 6, kind: input, shape index: {}]
  %s7 = inlined_call_operand.vmem [shape: f32[1,32], index: 7, kind: input, shape index: {}]
  %s8 = inlined_call_operand.vmem [shape: f32[32,64], index: 8, kind: input, shape index: {}]
  %s9 = inlined_call_operand.vmem [shape: f32[1,64], index: 9, kind: input, shape index: {}]
  %s10 = inlined_call_operand.vmem [shape: f32[64,32], index: 10, kind: input, shape index: {}]
  %s11 = inlined_call_operand.vmem [shape: f32[1,32], index: 11, kind: input, shape index: {}]
  %s12 = inlined_call_operand.vmem [shape: f32[1,32], index: 12, kind: input, shape index: {}]
  %s13 = inlined_call_operand.vmem [shape: f32[1,32], index: 13, kind: input, shape index: {}]
  %s14 = inlined_call_operand.vmem [shape: f32[32,128], index: 14, kind: input, shape index: {}]
  %s15 = inlined_call_operand.vmem [shape: f32[1,128], index: 15, kind: input, shape index: {}]
  %s16 = inlined_call_operand.vmem [shape: f32[128,3], index: 16, kind: input, shape index: {}]
  %s17 = inlined_call_operand.vmem [shape: f32[1,3], index: 17, kind: input, shape index: {}]
  %s18 = inlined_call_operand.hbm [shape: f32[2,3], index: 18, kind: output, shape index: {}]
  %s19 = sld [smem:[#allocation0]]
  $region82: #{tpu_custom_call.1} parent=0
    _
  %s21 = ssub.s32 1, %s19
  %s22 = scalar_select 0, %s21, %s19
  $region1: #{tpu_custom_call.1} parent=0
    #allocation2 [shape = 'u8[1024]{0}', space=vmem, size = 0x400, scoped, tag = 'output window, operand 0, single buffered']
    #allocation3 [shape = 's32[1]{0}', space=sflag, size = 0x4, scoped, tag = 'scoped memory for tpu_custom_call.1']
    %23 = vsyncpa [#allocation3], 0
    // Predicated region
    $region2: #{tpu_custom_call.1} parent=1 // pred_check
      _
    $region3: #{tpu_custom_call.1} parent=1 // pred_check_branch
      %25 = sbr.rel (0) target = $region5
    $region4: #{tpu_custom_call.1} parent=1 // pred_region
      _
    $region5: #{tpu_custom_call.1} parent=1 // pred_fallthru
      _
    // Predicated region
    $region6: #{tpu_custom_call.1} parent=1 // pred_check
      _
    $region7: #{tpu_custom_call.1} parent=1 // pred_check_branch
      %27 = sbr.rel (0) target = $region9
    $region8: #{tpu_custom_call.1} parent=1 // pred_region
      _
    $region9: #{tpu_custom_call.1} parent=1 // pred_fallthru
      _
    // Predicated region
    $region10: #{tpu_custom_call.1} parent=1 // pred_check
      _
    $region11: #{tpu_custom_call.1} parent=1 // pred_check_branch
      %29 = sbr.rel (0) target = $region13
    $region12: #{tpu_custom_call.1} parent=1 // pred_region
      _
    $region13: #{tpu_custom_call.1} parent=1 // pred_fallthru
      _
    // Predicated region
    $region14: #{tpu_custom_call.1} parent=1 // pred_check
      _
    $region15: #{tpu_custom_call.1} parent=1 // pred_check_branch
      %31 = sbr.rel (0) target = $region17
    $region16: #{tpu_custom_call.1} parent=1 // pred_region
      _
    $region17: #{tpu_custom_call.1} parent=1 // pred_fallthru
      _
    // Predicated region
    $region18: #{tpu_custom_call.1} parent=1 // pred_check
      _
    $region19: #{tpu_custom_call.1} parent=1 // pred_check_branch
      %33 = sbr.rel (0) target = $region21
    $region20: #{tpu_custom_call.1} parent=1 // pred_region
      _
    $region21: #{tpu_custom_call.1} parent=1 // pred_fallthru
      _
    // Predicated region
    $region22: #{tpu_custom_call.1} parent=1 // pred_check
      _
    $region23: #{tpu_custom_call.1} parent=1 // pred_check_branch
      %35 = sbr.rel (0) target = $region25
    $region24: #{tpu_custom_call.1} parent=1 // pred_region
      _
    $region25: #{tpu_custom_call.1} parent=1 // pred_fallthru
      _
    // Predicated region
    $region26: #{tpu_custom_call.1} parent=1 // pred_check
      _
    $region27: #{tpu_custom_call.1} parent=1 // pred_check_branch
      %37 = sbr.rel (0) target = $region29
    $region28: #{tpu_custom_call.1} parent=1 // pred_region
      _
    $region29: #{tpu_custom_call.1} parent=1 // pred_fallthru
      _
    // Predicated region
    $region30: #{tpu_custom_call.1} parent=1 // pred_check
      _
    $region31: #{tpu_custom_call.1} parent=1 // pred_check_branch
      %39 = sbr.rel (0) target = $region33
    $region32: #{tpu_custom_call.1} parent=1 // pred_region
      _
    $region33: #{tpu_custom_call.1} parent=1 // pred_fallthru
      _
    // Predicated region
    $region34: #{tpu_custom_call.1} parent=1 // pred_check
      _
    $region35: #{tpu_custom_call.1} parent=1 // pred_check_branch
      %41 = sbr.rel (0) target = $region37
    $region36: #{tpu_custom_call.1} parent=1 // pred_region
      _
    $region37: #{tpu_custom_call.1} parent=1 // pred_fallthru
      _
    // Predicated region
    $region38: #{tpu_custom_call.1} parent=1 // pred_check
      _
    $region39: #{tpu_custom_call.1} parent=1 // pred_check_branch
      %43 = sbr.rel (0) target = $region41
    $region40: #{tpu_custom_call.1} parent=1 // pred_region
      _
    $region41: #{tpu_custom_call.1} parent=1 // pred_fallthru
      _
    // Predicated region
    $region42: #{tpu_custom_call.1} parent=1 // pred_check
      _
    $region43: #{tpu_custom_call.1} parent=1 // pred_check_branch
      %45 = sbr.rel (0) target = $region45
    $region44: #{tpu_custom_call.1} parent=1 // pred_region
      _
    $region45: #{tpu_custom_call.1} parent=1 // pred_fallthru
      _
    // Predicated region
    $region46: #{tpu_custom_call.1} parent=1 // pred_check
      _
    $region47: #{tpu_custom_call.1} parent=1 // pred_check_branch
      %47 = sbr.rel (0) target = $region49
    $region48: #{tpu_custom_call.1} parent=1 // pred_region
      _
    $region49: #{tpu_custom_call.1} parent=1 // pred_fallthru
      _
    // Predicated region
    $region50: #{tpu_custom_call.1} parent=1 // pred_check
      _
    $region51: #{tpu_custom_call.1} parent=1 // pred_check_branch
      %49 = sbr.rel (0) target = $region53
    $region52: #{tpu_custom_call.1} parent=1 // pred_region
      _
    $region53: #{tpu_custom_call.1} parent=1 // pred_fallthru
      _
    // Predicated region
    $region54: #{tpu_custom_call.1} parent=1 // pred_check
      _
    $region55: #{tpu_custom_call.1} parent=1 // pred_check_branch
      %51 = sbr.rel (0) target = $region57
    $region56: #{tpu_custom_call.1} parent=1 // pred_region
      _
    $region57: #{tpu_custom_call.1} parent=1 // pred_fallthru
      _
    // Predicated region
    $region58: #{tpu_custom_call.1} parent=1 // pred_check
      _
    $region59: #{tpu_custom_call.1} parent=1 // pred_check_branch
      %53 = sbr.rel (0) target = $region61
    $region60: #{tpu_custom_call.1} parent=1 // pred_region
      _
    $region61: #{tpu_custom_call.1} parent=1 // pred_fallthru
      _
    // Predicated region
    $region62: #{tpu_custom_call.1} parent=1 // pred_check
      _
    $region63: #{tpu_custom_call.1} parent=1 // pred_check_branch
      %55 = sbr.rel (0) target = $region65
    $region64: #{tpu_custom_call.1} parent=1 // pred_region
      _
    $region65: #{tpu_custom_call.1} parent=1 // pred_fallthru
      _
    // Predicated region
    $region66: #{tpu_custom_call.1} parent=1 // pred_check
      _
    $region67: #{tpu_custom_call.1} parent=1 // pred_check_branch
      %57 = sbr.rel (0) target = $region69
    $region68: #{tpu_custom_call.1} parent=1 // pred_region
      _
    $region69: #{tpu_custom_call.1} parent=1 // pred_fallthru
      _
    // Predicated region
    $region70: #{tpu_custom_call.1} parent=1 // pred_check
      _
    $region71: #{tpu_custom_call.1} parent=1 // pred_check_branch
      %59 = sbr.rel (0) target = $region73
    $region72: #{tpu_custom_call.1} parent=1 // pred_region
      _
    $region73: #{tpu_custom_call.1} parent=1 // pred_fallthru
      _
    %v60 = vld [vmem:[%s0] sm:$0xff]
    %v61 = vld [vmem:[%s0 + $0x8] sm:$0xff]
    %v62 = vld [vmem:[%s1] sm:$0x1]
    %v63 = vld [vmem:[%s1 + $0x1] sm:$0x1]
    %v64 = vld [vmem:[%s2] sm:$0xff]
    %v65 = vld [vmem:[%s2 + $0x8] sm:$0xff]
    %v66 = vld [vmem:[%s2 + $0x10] sm:$0xff]
    %v67 = vld [vmem:[%s2 + $0x18] sm:$0xff]
    %v68 = vld [vmem:[%s3] sm:$0x1]
    %v70 = vperm.slane %v68, 0
    %vm72 = vcmask 261120
    %v74 = vsel %vm72, %v60, 0
    %v77 = vsel %vm72, %v61, 0
    %79 = vmatpush.msra.mxu0 0.0
    %80 = vmatpush.msra.mxu0 0.0
    %81 = vmatpush.msra.mxu0 0.0
    %82 = vmatpush.msra.mxu0 0.0
    %83 = vmatpush.msra.mxu0 0.0
    %84 = vmatpush.msra.mxu0 0.0
    %85 = vmatpush.msra.mxu0 0.0
    %86 = vmatpush.msra.mxu0 0.0
    %87 = vmatpush.msra.mxu0 0.0
    %88 = vmatpush.msra.mxu0 0.0
    %89 = vmatpush.msra.mxu0 0.0
    %90 = vmatpush.msra.mxu0 0.0
    %91 = vmatpush.msra.mxu0 %v67
    %92 = vmatpush.msra.mxu0 %v66
    %93 = vmatpush.msra.mxu0 %v65
    %94 = vmatpush.msra.mxu0 %v64
    %95 = vmatmul.f32.gmra.mxu0 %v74
    %v96 = vpop.f32.mrf.mxu0
    %v97 = vadd.f32 %v70, %v96
    %98 = vmatmul.f32.gmra.mxu0 %v77
    %v99 = vpop.f32.mrf.mxu0
    %v100 = vadd.f32 %v70, %v99
    %101 = vdwg.mxu0
    %v102 = vld [vmem:[%s4] sm:$0xff]
    %v103 = vld [vmem:[%s4 + $0x8] sm:$0xff]
    %v104 = vld [vmem:[%s4 + $0x10] sm:$0xff]
    %v105 = vld [vmem:[%s4 + $0x18] sm:$0xff]
    %107 = vrot.lane.b32.xlu0 %v97, 96
    %v108 = vpop.permute.xlu0 %107
    %vm109 = vcmask 130048
    %v110 = vsel %vm109, %v97, 0
    %v112 = vsel %vm109, %v108, 0
    %114 = vmatpush.xpose.msra.mxu0 0.0
    %115 = vmatpush.xpose.msra.mxu0 0.0
    %116 = vmatpush.xpose.msra.mxu0 0.0
    %117 = vmatpush.xpose.msra.mxu0 0.0
    %118 = vmatpush.xpose.msra.mxu0 0.0
    %119 = vmatpush.xpose.msra.mxu0 0.0
    %120 = vmatpush.xpose.msra.mxu0 0.0
    %121 = vmatpush.xpose.msra.mxu0 0.0
    %122 = vmatpush.xpose.msra.mxu0 0.0
    %123 = vmatpush.xpose.msra.mxu0 0.0
    %124 = vmatpush.xpose.msra.mxu0 0.0
    %125 = vmatpush.xpose.msra.mxu0 0.0
    %126 = vmatpush.xpose.msra.mxu0 0.0
    %127 = vmatpush.xpose.msra.mxu0 0.0
    %128 = vmatpush.xpose.msra.mxu0 0.0
    %129 = vmatpush.xpose.msra.mxu0 %v112
    %130 = vmatmul.f32.gmra.mxu0 %v110
    %v131 = vpop.f32.mrf.mxu0
    %v132 = vadd.f32 0.0, %v131
    %133 = vdwg.mxu0
    %135 = vrot.lane.b32.xlu0 %v100, 96
    %v136 = vpop.permute.xlu0 %135
    %v137 = vsel %vm109, %v100, 0
    %v139 = vsel %vm109, %v136, 0
    %141 = vmatpush.xpose.msra.mxu0 0.0
    %142 = vmatpush.xpose.msra.mxu0 0.0
    %143 = vmatpush.xpose.msra.mxu0 0.0
    %144 = vmatpush.xpose.msra.mxu0 0.0
    %145 = vmatpush.xpose.msra.mxu0 0.0
    %146 = vmatpush.xpose.msra.mxu0 0.0
    %147 = vmatpush.xpose.msra.mxu0 0.0
    %148 = vmatpush.xpose.msra.mxu0 0.0
    %149 = vmatpush.xpose.msra.mxu0 0.0
    %150 = vmatpush.xpose.msra.mxu0 0.0
    %151 = vmatpush.xpose.msra.mxu0 0.0
    %152 = vmatpush.xpose.msra.mxu0 0.0
    %153 = vmatpush.xpose.msra.mxu0 0.0
    %154 = vmatpush.xpose.msra.mxu0 0.0
    %155 = vmatpush.xpose.msra.mxu0 0.0
    %156 = vmatpush.xpose.msra.mxu0 %v139
    %157 = vmatmul.f32.gmra.mxu0 %v137
    %v158 = vpop.f32.mrf.mxu0
    %v159 = vadd.f32 0.0, %v158
    %160 = vdwg.mxu0
    %v161 = vmul.f32 %v132, 0.25
    %v162 = vmul.f32 %v159, 0.25
    %v165 = vperm.slane %v62, 0
    %v166 = vperm.slane %v63, 0
    %v169 = vadd.f32 %v161, %v165
    %v170 = vadd.f32 %v162, %v166
    %vm171 = vcmask 64512
    %v172 = vsel %vm171, %v169, -inf
    %173 = vmax.xlane.f32.xlu0 %v172
    %v174 = vpop.xlane.xlu0 %173
    %v175 = vsel %vm171, %v170, -inf
    %176 = vmax.xlane.f32.xlu0 %v175
    %v177 = vpop.xlane.xlu0 %176
    %v178 = vsub.f32 %v169, %v174
    %v179 = vsub.f32 %v170, %v177
    %v180 = vmul.f32 %v178, 1.442695
    %v181 = vpow.pop %v180
    %v182 = vmul.f32 %v179, 1.442695
    %v183 = vpow.pop %v182
    %v184 = vsel %vm171, %v181, 0.0
    %185 = vadd.xlane.f32.xlu0 %v184
    %v186 = vpop.xlane.xlu0 %185
    %v187 = vsel %vm171, %v183, 0.0
    %188 = vadd.xlane.f32.xlu0 %v187
    %v189 = vpop.xlane.xlu0 %188
    %v190 = vrcp.pop %v186
    %v191 = vrcp.pop %v189
    %v192 = vmul.f32 %v181, %v190
    %v193 = vmul.f32 %v183, %v191
    %194 = vrot.lane.b32.xlu0 %v97, 64
    %v195 = vpop.permute.xlu0 %194
    %v198 = vsel %vm171, %v192, 0
    %200 = vmatpush.msra.mxu0 0.0
    %201 = vmatpush.msra.mxu0 0.0
    %202 = vmatpush.msra.mxu0 0.0
    %203 = vmatpush.msra.mxu0 0.0
    %204 = vmatpush.msra.mxu0 0.0
    %205 = vmatpush.msra.mxu0 0.0
    %206 = vmatpush.msra.mxu0 0.0
    %207 = vmatpush.msra.mxu0 0.0
    %208 = vmatpush.msra.mxu0 0.0
    %209 = vmatpush.msra.mxu0 0.0
    %210 = vmatpush.msra.mxu0 0.0
    %211 = vmatpush.msra.mxu0 0.0
    %212 = vmatpush.msra.mxu0 0.0
    %213 = vmatpush.msra.mxu0 0.0
    %214 = vmatpush.msra.mxu0 0.0
    %215 = vmatpush.msra.mxu0 %v195
    %216 = vmatmul.f32.gmra.mxu0 %v198
    %v217 = vpop.f32.mrf.mxu0
    %v218 = vadd.f32 0.0, %v217
    %219 = vdwg.mxu0
    %220 = vrot.lane.b32.xlu0 %v100, 64
    %v221 = vpop.permute.xlu0 %220
    %v224 = vsel %vm171, %v193, 0
    %226 = vmatpush.msra.mxu0 0.0
    %227 = vmatpush.msra.mxu0 0.0
    %228 = vmatpush.msra.mxu0 0.0
    %229 = vmatpush.msra.mxu0 0.0
    %230 = vmatpush.msra.mxu0 0.0
    %231 = vmatpush.msra.mxu0 0.0
    %232 = vmatpush.msra.mxu0 0.0
    %233 = vmatpush.msra.mxu0 0.0
    %234 = vmatpush.msra.mxu0 0.0
    %235 = vmatpush.msra.mxu0 0.0
    %236 = vmatpush.msra.mxu0 0.0
    %237 = vmatpush.msra.mxu0 0.0
    %238 = vmatpush.msra.mxu0 0.0
    %239 = vmatpush.msra.mxu0 0.0
    %240 = vmatpush.msra.mxu0 0.0
    %241 = vmatpush.msra.mxu0 %v221
    %242 = vmatmul.f32.gmra.mxu0 %v224
    %v243 = vpop.f32.mrf.mxu0
    %v244 = vadd.f32 0.0, %v243
    %245 = vdwg.mxu0
    %246 = vrot.lane.b32.xlu0 %v97, 112
    %v247 = vpop.permute.xlu0 %246
    %248 = vrot.lane.b32.xlu0 %v97, 80
    %v249 = vpop.permute.xlu0 %248
    %v250 = vsel %vm109, %v247, 0
    %v252 = vsel %vm109, %v249, 0
    %254 = vmatpush.xpose.msra.mxu0 0.0
    %255 = vmatpush.xpose.msra.mxu0 0.0
    %256 = vmatpush.xpose.msra.mxu0 0.0
    %257 = vmatpush.xpose.msra.mxu0 0.0
    %258 = vmatpush.xpose.msra.mxu0 0.0
    %259 = vmatpush.xpose.msra.mxu0 0.0
    %260 = vmatpush.xpose.msra.mxu0 0.0
    %261 = vmatpush.xpose.msra.mxu0 0.0
    %262 = vmatpush.xpose.msra.mxu0 0.0
    %263 = vmatpush.xpose.msra.mxu0 0.0
    %264 = vmatpush.xpose.msra.mxu0 0.0
    %265 = vmatpush.xpose.msra.mxu0 0.0
    %266 = vmatpush.xpose.msra.mxu0 0.0
    %267 = vmatpush.xpose.msra.mxu0 0.0
    %268 = vmatpush.xpose.msra.mxu0 0.0
    %269 = vmatpush.xpose.msra.mxu0 %v252
    %270 = vmatmul.f32.gmra.mxu0 %v250
    %v271 = vpop.f32.mrf.mxu0
    %v272 = vadd.f32 0.0, %v271
    %273 = vdwg.mxu0
    %274 = vrot.lane.b32.xlu0 %v100, 112
    %v275 = vpop.permute.xlu0 %274
    %276 = vrot.lane.b32.xlu0 %v100, 80
    %v277 = vpop.permute.xlu0 %276
    %v278 = vsel %vm109, %v275, 0
    %v280 = vsel %vm109, %v277, 0
    %282 = vmatpush.xpose.msra.mxu0 0.0
    %283 = vmatpush.xpose.msra.mxu0 0.0
    %284 = vmatpush.xpose.msra.mxu0 0.0
    %285 = vmatpush.xpose.msra.mxu0 0.0
    %286 = vmatpush.xpose.msra.mxu0 0.0
    %287 = vmatpush.xpose.msra.mxu0 0.0
    %288 = vmatpush.xpose.msra.mxu0 0.0
    %289 = vmatpush.xpose.msra.mxu0 0.0
    %290 = vmatpush.xpose.msra.mxu0 0.0
    %291 = vmatpush.xpose.msra.mxu0 0.0
    %292 = vmatpush.xpose.msra.mxu0 0.0
    %293 = vmatpush.xpose.msra.mxu0 0.0
    %294 = vmatpush.xpose.msra.mxu0 0.0
    %295 = vmatpush.xpose.msra.mxu0 0.0
    %296 = vmatpush.xpose.msra.mxu0 0.0
    %297 = vmatpush.xpose.msra.mxu0 %v280
    %298 = vmatmul.f32.gmra.mxu0 %v278
    %v299 = vpop.f32.mrf.mxu0
    %v300 = vadd.f32 0.0, %v299
    %301 = vdwg.mxu0
    %v302 = vmul.f32 %v272, 0.25
    %v303 = vmul.f32 %v300, 0.25
    %v304 = vadd.f32 %v302, %v165
    %v305 = vadd.f32 %v303, %v166
    %v306 = vsel %vm171, %v304, -inf
    %307 = vmax.xlane.f32.xlu0 %v306
    %v308 = vpop.xlane.xlu0 %307
    %v309 = vsel %vm171, %v305, -inf
    %310 = vmax.xlane.f32.xlu0 %v309
    %v311 = vpop.xlane.xlu0 %310
    %v312 = vsub.f32 %v304, %v308
    %v313 = vsub.f32 %v305, %v311
    %v314 = vmul.f32 %v312, 1.442695
    %v315 = vpow.pop %v314
    %v316 = vmul.f32 %v313, 1.442695
    %v317 = vpow.pop %v316
    %v318 = vsel %vm171, %v315, 0.0
    %319 = vadd.xlane.f32.xlu0 %v318
    %v320 = vpop.xlane.xlu0 %319
    %v321 = vsel %vm171, %v317, 0.0
    %322 = vadd.xlane.f32.xlu0 %v321
    %v323 = vpop.xlane.xlu0 %322
    %v324 = vrcp.pop %v320
    %v325 = vrcp.pop %v323
    %v326 = vmul.f32 %v315, %v324
    %v327 = vmul.f32 %v317, %v325
    %328 = vrot.lane.b32.xlu0 %v97, 48
    %v329 = vpop.permute.xlu0 %328
    %v332 = vsel %vm171, %v326, 0
    %334 = vmatpush.msra.mxu0 0.0
    %335 = vmatpush.msra.mxu0 0.0
    %336 = vmatpush.msra.mxu0 0.0
    %337 = vmatpush.msra.mxu0 0.0
    %338 = vmatpush.msra.mxu0 0.0
    %339 = vmatpush.msra.mxu0 0.0
    %340 = vmatpush.msra.mxu0 0.0
    %341 = vmatpush.msra.mxu0 0.0
    %342 = vmatpush.msra.mxu0 0.0
    %343 = vmatpush.msra.mxu0 0.0
    %344 = vmatpush.msra.mxu0 0.0
    %345 = vmatpush.msra.mxu0 0.0
    %346 = vmatpush.msra.mxu0 0.0
    %347 = vmatpush.msra.mxu0 0.0
    %348 = vmatpush.msra.mxu0 0.0
    %349 = vmatpush.msra.mxu0 %v329
    %350 = vmatmul.f32.gmra.mxu0 %v332
    %v351 = vpop.f32.mrf.mxu0
    %v352 = vadd.f32 0.0, %v351
    %353 = vdwg.mxu0
    %354 = vrot.lane.b32.xlu0 %v100, 48
    %v355 = vpop.permute.xlu0 %354
    %v358 = vsel %vm171, %v327, 0
    %360 = vmatpush.msra.mxu0 0.0
    %361 = vmatpush.msra.mxu0 0.0
    %362 = vmatpush.msra.mxu0 0.0
    %363 = vmatpush.msra.mxu0 0.0
    %364 = vmatpush.msra.mxu0 0.0
    %365 = vmatpush.msra.mxu0 0.0
    %366 = vmatpush.msra.mxu0 0.0
    %367 = vmatpush.msra.mxu0 0.0
    %368 = vmatpush.msra.mxu0 0.0
    %369 = vmatpush.msra.mxu0 0.0
    %370 = vmatpush.msra.mxu0 0.0
    %371 = vmatpush.msra.mxu0 0.0
    %372 = vmatpush.msra.mxu0 0.0
    %373 = vmatpush.msra.mxu0 0.0
    %374 = vmatpush.msra.mxu0 0.0
    %375 = vmatpush.msra.mxu0 %v355
    %376 = vmatmul.f32.gmra.mxu0 %v358
    %v377 = vpop.f32.mrf.mxu0
    %v378 = vadd.f32 0.0, %v377
    %379 = vdwg.mxu0
    %v381 = vsel %vm109, %v352, 0
    %v384 = vsel %vm109, %v378, 0
    %386 = vmatpush.msra.mxu0 0.0
    %387 = vmatpush.msra.mxu0 0.0
    %388 = vmatpush.msra.mxu0 0.0
    %389 = vmatpush.msra.mxu0 0.0
    %390 = vmatpush.msra.mxu0 0.0
    %391 = vmatpush.msra.mxu0 0.0
    %392 = vmatpush.msra.mxu0 0.0
    %393 = vmatpush.msra.mxu0 0.0
    %394 = vmatpush.msra.mxu0 0.0
    %395 = vmatpush.msra.mxu0 0.0
    %396 = vmatpush.msra.mxu0 0.0
    %397 = vmatpush.msra.mxu0 0.0
    %398 = vmatpush.msra.mxu0 0.0
    %399 = vmatpush.msra.mxu0 0.0
    %400 = vmatpush.msra.mxu0 %v105
    %401 = vmatpush.msra.mxu0 %v104
    %402 = vmatmul.f32.gmra.mxu0 %v381
    %v403 = vpop.f32.mrf.mxu0
    %v404 = vadd.f32 0.0, %v403
    %405 = vmatmul.f32.gmra.mxu0 %v384
    %v406 = vpop.f32.mrf.mxu0
    %v407 = vadd.f32 0.0, %v406
    %408 = vdwg.mxu0
    %v410 = vsel %vm109, %v218, 0
    %v413 = vsel %vm109, %v244, 0
    %415 = vmatpush.msra.mxu0 0.0
    %416 = vmatpush.msra.mxu0 0.0
    %417 = vmatpush.msra.mxu0 0.0
    %418 = vmatpush.msra.mxu0 0.0
    %419 = vmatpush.msra.mxu0 0.0
    %420 = vmatpush.msra.mxu0 0.0
    %421 = vmatpush.msra.mxu0 0.0
    %422 = vmatpush.msra.mxu0 0.0
    %423 = vmatpush.msra.mxu0 0.0
    %424 = vmatpush.msra.mxu0 0.0
    %425 = vmatpush.msra.mxu0 0.0
    %426 = vmatpush.msra.mxu0 0.0
    %427 = vmatpush.msra.mxu0 0.0
    %428 = vmatpush.msra.mxu0 0.0
    %429 = vmatpush.msra.mxu0 %v103
    %430 = vmatpush.msra.mxu0 %v102
    %431 = vmatmul.f32.gmra.mxu0 %v410
    %v432 = vpop.f32.mrf.mxu0
    %v433 = vadd.f32 %v404, %v432
    %434 = vmatmul.f32.gmra.mxu0 %v413
    %v435 = vpop.f32.mrf.mxu0
    %v436 = vadd.f32 %v407, %v435
    %437 = vdwg.mxu0
    %v438 = vld [vmem:[%s5] sm:$0x1]
    %v440 = vperm.slane %v438, 0
    %v442 = vadd.f32 %v433, %v440
    %v443 = vadd.f32 %v436, %v440
    %v444 = vadd.f32 %v60, %v442
    %v445 = vadd.f32 %v61, %v443
    %v446 = vld [vmem:[%s6] sm:$0x1]
    %v447 = vld [vmem:[%s7] sm:$0x1]
    %v448 = vsel %vm72, %v444, 0.0
    %449 = vadd.xlane.f32.xlu0 %v448
    %v450 = vpop.xlane.xlu0 %449
    %v451 = vsel %vm72, %v445, 0.0
    %452 = vadd.xlane.f32.xlu0 %v451
    %v453 = vpop.xlane.xlu0 %452
    %v454 = vrcp.pop 32.0
    %v455 = vmul.f32 32.0, %v454
    %v456 = vsub.f32 1.0, %v455
    %v457 = vmul.f32 %v454, %v456
    %v458 = vadd.f32 %v454, %v457
    %vm459 = vweird.f32 %v454
    %v460 = vsel %vm459, %v454, %v458
    %v461 = vmul.f32 %v450, %v460
    %v462 = vmul.f32 %v453, %v460
    %v463 = vsub.f32 %v444, %v461
    %v464 = vsub.f32 %v445, %v462
    %v465 = vmul.f32 %v463, %v463
    %v466 = vmul.f32 %v464, %v464
    %v467 = vsel %vm72, %v465, 0.0
    %468 = vadd.xlane.f32.xlu0 %v467
    %v469 = vpop.xlane.xlu0 %468
    %v470 = vsel %vm72, %v466, 0.0
    %471 = vadd.xlane.f32.xlu0 %v470
    %v472 = vpop.xlane.xlu0 %471
    %v473 = vmul.f32 %v469, %v460
    %v474 = vmul.f32 %v472, %v460
    %v475 = vadd.f32 %v473, 1e-12
    %v476 = vadd.f32 %v474, 1e-12
    %v477 = vrsqrt.pop %v475
    %v478 = vmul.f32 %v477, %v475
    %v479 = vmul.f32 %v478, %v477
    %v480 = vmul.f32 0.5, %v479
    %v481 = vsub.f32 1.5, %v480
    %v482 = vmul.f32 %v477, %v481
    %vm483 = vweird.f32 %v475
    %vm484 = vweird.f32 %v477
    %vm485 = vmor %vm483, %vm484
    %v486 = vsel %vm485, %v477, %v482
    %v487 = vrsqrt.pop %v476
    %v488 = vmul.f32 %v487, %v476
    %v489 = vmul.f32 %v488, %v487
    %v490 = vmul.f32 0.5, %v489
    %v491 = vsub.f32 1.5, %v490
    %v492 = vmul.f32 %v487, %v491
    %vm493 = vweird.f32 %v476
    %vm494 = vweird.f32 %v487
    %vm495 = vmor %vm493, %vm494
    %v496 = vsel %vm495, %v487, %v492
    %v497 = vmul.f32 %v463, %v486
    %v498 = vmul.f32 %v464, %v496
    %v500 = vperm.slane %v446, 0
    %v502 = vmul.f32 %v497, %v500
    %v503 = vmul.f32 %v498, %v500
    %v505 = vperm.slane %v447, 0
    %v507 = vadd.f32 %v502, %v505
    %v508 = vadd.f32 %v503, %v505
    %v509 = vld [vmem:[%s8] sm:$0xff]
    %v510 = vld [vmem:[%s8 + $0x8] sm:$0xff]
    %v511 = vld [vmem:[%s8 + $0x10] sm:$0xff]
    %v512 = vld [vmem:[%s8 + $0x18] sm:$0xff]
    %v513 = vld [vmem:[%s9] sm:$0x1]
    %v515 = vperm.slane %v513, 0
    %v518 = vsel %vm72, %v507, 0
    %v521 = vsel %vm72, %v508, 0
    %523 = vmatpush.msra.mxu0 0.0
    %524 = vmatpush.msra.mxu0 0.0
    %525 = vmatpush.msra.mxu0 0.0
    %526 = vmatpush.msra.mxu0 0.0
    %527 = vmatpush.msra.mxu0 0.0
    %528 = vmatpush.msra.mxu0 0.0
    %529 = vmatpush.msra.mxu0 0.0
    %530 = vmatpush.msra.mxu0 0.0
    %531 = vmatpush.msra.mxu0 0.0
    %532 = vmatpush.msra.mxu0 0.0
    %533 = vmatpush.msra.mxu0 0.0
    %534 = vmatpush.msra.mxu0 0.0
    %535 = vmatpush.msra.mxu0 %v512
    %536 = vmatpush.msra.mxu0 %v511
    %537 = vmatpush.msra.mxu0 %v510
    %538 = vmatpush.msra.mxu0 %v509
    %539 = vmatmul.f32.gmra.mxu0 %v518
    %v540 = vpop.f32.mrf.mxu0
    %v541 = vadd.f32 %v515, %v540
    %542 = vmatmul.f32.gmra.mxu0 %v521
    %v543 = vpop.f32.mrf.mxu0
    %v544 = vadd.f32 %v515, %v543
    %545 = vdwg.mxu0
    %v546 = vmul.f32 %v541, 0.5
    %v547 = vmul.f32 %v544, 0.5
    %v548 = vmul.f32 %v541, 0.044715
    %v549 = vmul.f32 %v544, 0.044715
    %v550 = vmul.f32 %v548, %v541
    %v551 = vmul.f32 %v549, %v544
    %v552 = vmul.f32 %v550, %v541
    %v553 = vmul.f32 %v551, %v544
    %v554 = vadd.f32 %v541, %v552
    %v555 = vadd.f32 %v544, %v553
    %v556 = vmul.f32 %v554, 0.7978846
    %v557 = vmul.f32 %v555, 0.7978846
    %v558 = vtanh.pop %v556
    %v559 = vtanh.pop %v557
    %v560 = vadd.f32 %v558, 1.0
    %v561 = vadd.f32 %v559, 1.0
    %v562 = vmul.f32 %v546, %v560
    %v563 = vmul.f32 %v547, %v561
    %v564 = vld [vmem:[%s10] sm:$0xff]
    %v565 = vld [vmem:[%s10 + $0x8] sm:$0xff]
    %v566 = vld [vmem:[%s10 + $0x10] sm:$0xff]
    %v567 = vld [vmem:[%s10 + $0x18] sm:$0xff]
    %v568 = vld [vmem:[%s10 + $0x20] sm:$0xff]
    %v569 = vld [vmem:[%s10 + $0x28] sm:$0xff]
    %v570 = vld [vmem:[%s10 + $0x30] sm:$0xff]
    %v571 = vld [vmem:[%s10 + $0x38] sm:$0xff]
    %v572 = vld [vmem:[%s11] sm:$0x1]
    %v574 = vperm.slane %v572, 0
    %vm576 = vcmask 523264
    %v578 = vsel %vm576, %v562, 0
    %v581 = vsel %vm576, %v563, 0
    %583 = vmatpush.msra.mxu0 0.0
    %584 = vmatpush.msra.mxu0 0.0
    %585 = vmatpush.msra.mxu0 0.0
    %586 = vmatpush.msra.mxu0 0.0
    %587 = vmatpush.msra.mxu0 0.0
    %588 = vmatpush.msra.mxu0 0.0
    %589 = vmatpush.msra.mxu0 0.0
    %590 = vmatpush.msra.mxu0 0.0
    %591 = vmatpush.msra.mxu0 %v571
    %592 = vmatpush.msra.mxu0 %v570
    %593 = vmatpush.msra.mxu0 %v569
    %594 = vmatpush.msra.mxu0 %v568
    %595 = vmatpush.msra.mxu0 %v567
    %596 = vmatpush.msra.mxu0 %v566
    %597 = vmatpush.msra.mxu0 %v565
    %598 = vmatpush.msra.mxu0 %v564
    %599 = vmatmul.f32.gmra.mxu0 %v578
    %v600 = vpop.f32.mrf.mxu0
    %v601 = vadd.f32 %v574, %v600
    %602 = vmatmul.f32.gmra.mxu0 %v581
    %v603 = vpop.f32.mrf.mxu0
    %v604 = vadd.f32 %v574, %v603
    %605 = vdwg.mxu0
    %v606 = vadd.f32 %v507, %v601
    %v607 = vadd.f32 %v508, %v604
    %v608 = vld [vmem:[%s12] sm:$0x1]
    %v609 = vld [vmem:[%s13] sm:$0x1]
    %v610 = vsel %vm72, %v606, 0.0
    %611 = vadd.xlane.f32.xlu0 %v610
    %v612 = vpop.xlane.xlu0 %611
    %v613 = vsel %vm72, %v607, 0.0
    %614 = vadd.xlane.f32.xlu0 %v613
    %v615 = vpop.xlane.xlu0 %614
    %v616 = vmul.f32 %v612, %v460
    %v617 = vmul.f32 %v615, %v460
    %v618 = vsub.f32 %v606, %v616
    %v619 = vsub.f32 %v607, %v617
    %v620 = vmul.f32 %v618, %v618
    %v621 = vmul.f32 %v619, %v619
    %v622 = vsel %vm72, %v620, 0.0
    %623 = vadd.xlane.f32.xlu0 %v622
    %v624 = vpop.xlane.xlu0 %623
    %v625 = vsel %vm72, %v621, 0.0
    %626 = vadd.xlane.f32.xlu0 %v625
    %v627 = vpop.xlane.xlu0 %626
    %v628 = vmul.f32 %v624, %v460
    %v629 = vmul.f32 %v627, %v460
    %v630 = vadd.f32 %v628, 1e-12
    %v631 = vadd.f32 %v629, 1e-12
    %v632 = vrsqrt.pop %v630
    %v633 = vmul.f32 %v632, %v630
    %v634 = vmul.f32 %v633, %v632
    %v635 = vmul.f32 0.5, %v634
    %v636 = vsub.f32 1.5, %v635
    %v637 = vmul.f32 %v632, %v636
    %vm638 = vweird.f32 %v630
    %vm639 = vweird.f32 %v632
    %vm640 = vmor %vm638, %vm639
    %v641 = vsel %vm640, %v632, %v637
    %v642 = vrsqrt.pop %v631
    %v643 = vmul.f32 %v642, %v631
    %v644 = vmul.f32 %v643, %v642
    %v645 = vmul.f32 0.5, %v644
    %v646 = vsub.f32 1.5, %v645
    %v647 = vmul.f32 %v642, %v646
    %vm648 = vweird.f32 %v631
    %vm649 = vweird.f32 %v642
    %vm650 = vmor %vm648, %vm649
    %v651 = vsel %vm650, %v642, %v647
    %v652 = vmul.f32 %v618, %v641
    %v653 = vmul.f32 %v619, %v651
    %v655 = vperm.slane %v608, 0
    %v657 = vmul.f32 %v652, %v655
    %v658 = vmul.f32 %v653, %v655
    %v660 = vperm.slane %v609, 0
    %v662 = vadd.f32 %v657, %v660
    %v663 = vadd.f32 %v658, %v660
    %v665 = vrot.slane %v663, 7
    %vm667 = vcmask 1040384
    %v668 = vsel %vm667, %v662, %v665
    %v669 = vld [vmem:[%s14] sm:$0xff]
    %v670 = vld [vmem:[%s14 + $0x8] sm:$0xff]
    %v671 = vld [vmem:[%s14 + $0x10] sm:$0xff]
    %v672 = vld [vmem:[%s14 + $0x18] sm:$0xff]
    %v673 = vld [vmem:[%s15] sm:$0x1]
    %v675 = vperm.slane %v673, 0
    %v678 = vsel %vm72, %v668, 0
    %680 = vmatpush.msra.mxu0 0.0
    %681 = vmatpush.msra.mxu0 0.0
    %682 = vmatpush.msra.mxu0 0.0
    %683 = vmatpush.msra.mxu0 0.0
    %684 = vmatpush.msra.mxu0 0.0
    %685 = vmatpush.msra.mxu0 0.0
    %686 = vmatpush.msra.mxu0 0.0
    %687 = vmatpush.msra.mxu0 0.0
    %688 = vmatpush.msra.mxu0 0.0
    %689 = vmatpush.msra.mxu0 0.0
    %690 = vmatpush.msra.mxu0 0.0
    %691 = vmatpush.msra.mxu0 0.0
    %692 = vmatpush.msra.mxu0 %v672
    %693 = vmatpush.msra.mxu0 %v671
    %694 = vmatpush.msra.mxu0 %v670
    %695 = vmatpush.msra.mxu0 %v669
    %696 = vmatmul.f32.gmra.mxu0 %v678
    %v697 = vpop.f32.mrf.mxu0
    %v698 = vadd.f32 %v675, %v697
    %699 = vdwg.mxu0
    %v700 = vld [vmem:[%s16] sm:$0xff]
    %v701 = vld [vmem:[%s16 + $0x8] sm:$0xff]
    %v702 = vld [vmem:[%s16 + $0x10] sm:$0xff]
    %v703 = vld [vmem:[%s16 + $0x18] sm:$0xff]
    %v704 = vld [vmem:[%s16 + $0x20] sm:$0xff]
    %v705 = vld [vmem:[%s16 + $0x28] sm:$0xff]
    %v706 = vld [vmem:[%s16 + $0x30] sm:$0xff]
    %v707 = vld [vmem:[%s16 + $0x38] sm:$0xff]
    %v708 = vld [vmem:[%s16 + $0x40] sm:$0xff]
    %v709 = vld [vmem:[%s16 + $0x48] sm:$0xff]
    %v710 = vld [vmem:[%s16 + $0x50] sm:$0xff]
    %v711 = vld [vmem:[%s16 + $0x58] sm:$0xff]
    %v712 = vld [vmem:[%s16 + $0x60] sm:$0xff]
    %v713 = vld [vmem:[%s16 + $0x68] sm:$0xff]
    %v714 = vld [vmem:[%s16 + $0x70] sm:$0xff]
    %v715 = vld [vmem:[%s16 + $0x78] sm:$0xff]
    %v716 = vld [vmem:[%s17] sm:$0x1]
    %v718 = vperm.slane %v716, 0
    %720 = vmatpush.msra.mxu0 %v715
    %721 = vmatpush.msra.mxu0 %v714
    %722 = vmatpush.msra.mxu0 %v713
    %723 = vmatpush.msra.mxu0 %v712
    %724 = vmatpush.msra.mxu0 %v711
    %725 = vmatpush.msra.mxu0 %v710
    %726 = vmatpush.msra.mxu0 %v709
    %727 = vmatpush.msra.mxu0 %v708
    %728 = vmatpush.msra.mxu0 %v707
    %729 = vmatpush.msra.mxu0 %v706
    %730 = vmatpush.msra.mxu0 %v705
    %731 = vmatpush.msra.mxu0 %v704
    %732 = vmatpush.msra.mxu0 %v703
    %733 = vmatpush.msra.mxu0 %v702
    %734 = vmatpush.msra.mxu0 %v701
    %735 = vmatpush.msra.mxu0 %v700
    %736 = vmatmul.f32.gmra.mxu0 %v698
    %v737 = vpop.f32.mrf.mxu0
    %v738 = vadd.f32 %v718, %v737
    %739 = vdwg.mxu0
    %vm740 = vcmask 17408
    %741 = vst.msk [vmem:[#allocation2] sm:$0x3] %vm740, %v738
    // Predicated region
    $region74: #{tpu_custom_call.1} parent=1 // pred_check
      _
    $region75: #{tpu_custom_call.1} parent=1 // pred_check_branch
      %743 = sbr.rel (0) target = $region77
    $region76: #{tpu_custom_call.1} parent=1 // pred_region
      %745 = vsyncadd [#allocation3], 0
      %s747 = sshll.u32 [#allocation2], 4
      %s748 = int_to_ptr.vmem [resolvable:$true] %s747
      %s749 = sshll.u32 %s18, 4
      %s750 = int_to_ptr.hbm [resolvable:$true] %s749
      %752 = dma.vmem_to_hbm [thread:$0]  %s748, 32, %s750, [#allocation3]
    $region77: #{tpu_custom_call.1} parent=1 // pred_fallthru
      _
    // Predicated region
    $region78: #{tpu_custom_call.1} parent=1 // pred_check
      _
    $region79: #{tpu_custom_call.1} parent=1 // pred_check_branch
      %754 = sbr.rel (0) target = $region81
    $region80: #{tpu_custom_call.1} parent=1 // pred_region
      %756 = dma.done [#allocation3], 32
    $region81: #{tpu_custom_call.1} parent=1 // pred_fallthru
      _
    %757 = vsyncpa [#allocation3], 1

</llo_original>
